<compile_context>
chip_gen: v7x
topology: tpu7x:2x2x1
jax: 0.10.0
libtpu: 0.0.40
codegen_flags: <defaults>
</compile_context>

<pallas_src>
import jax
import jax.numpy as jnp
from jax.experimental import pallas as pl
from jax.experimental.pallas import tpu as pltpu


def _round_down(x, m):
    return (x // m) * m


def _vmem_capacity_bytes():
    """Generation-aware VMEM capacity (v5e/v6e: 128 MiB, v7x: 64 MiB)."""
    try:
        info = pltpu.get_tpu_info()
        cap = int(getattr(info, "vmem_capacity_bytes", 0))
        if cap > 0:
            return cap
    except Exception:
        pass
    return 64 << 20  # conservative fallback (v7x per-TensorCore VMEM)


def _pick_tiles(B, C, HW, itemsize, vmem_budget, target_block_bytes=2 << 20):
    """Pick (TB, THW) with ZERO host-side padding.

    Legality invariants (so every BlockSpec satisfies the (8, 128) rule):
      * TB == B (small batch) or TB % 8 == 0
      * THW == HW or THW % 128 == 0
    Partial tail tiles (B % TB != 0, HW % THW != 0) are handled by Pallas's
    boundary masking, so no wasted HBM traffic is generated for them.
    """
    ch = min(C, 8 if itemsize >= 4 else 16)          # f32: 8 sublanes, bf16: 16

    def step_vmem(tb, thw):
        lane = lambda n: max(n, 128)                  # VMEM lane padding
        return (2 * tb * C * lane(thw) * itemsize     # snd blocks (double-buffered)
                + 2 * tb * lane(thw) * 4              # out blocks (f32)
                + 2 * tb * lane(C) * 4                # gate blocks (f32)
                + tb * ch * lane(thw) * 4             # per-chunk f32 upcast
                + tb * lane(thw) * 4)                 # f32 accumulator

    tb_unit = B if B <= 8 else 8                      # smallest legal batch tile

    # ---- spatial tile ----------------------------------------------------
    thw = HW
    if HW >= 256:
        hw_floor = _round_down(HW, 128)
        too_big = (tb_unit * C * HW * itemsize > target_block_bytes
                   or step_vmem(tb_unit, HW) > vmem_budget)
        if too_big:
            t = max(128, target_block_bytes // max(tb_unit * C * itemsize, 1))
            thw = max(128, min(_round_down(t, 128), hw_floor))
            while thw > 128 and step_vmem(tb_unit, thw) > vmem_budget:
                thw -= 128
        elif B <= 8:
            # Batch gives a single tile; split HW so both v7x TensorCores
            # (and the DMA pipeline) see >= 2 parallel blocks.
            thw = max(128, min(_round_down(HW // 2, 128), hw_floor))
    # TODO(synk): if even a (tb_unit, 128) block exceeds the VMEM budget (huge C),
    # add a C reduction grid axis with a VMEM scratch accumulator; not needed
    # for fc_dim-scale channel counts.

    # ---- batch tile --------------------------------------------------------
    if B <= 8:
        tb = B
    else:
        max_tb = max(8, _round_down((B + 1) // 2, 8))   # keep >= 2 batch tiles
        tb = 8
        while (tb + 8 <= max_tb
               and (tb + 8) * C * thw * itemsize <= target_block_bytes
               and step_vmem(tb + 8, thw) <= vmem_budget):
            tb += 8
        # Prefer an exact divisor of B (no partial tail tile) when available.
        for d in range(tb, 7, -8):
            if B % d == 0:
                tb = d
                break
    return tb, thw


def _synth_kernel(gate_ref, snd_ref, bias_ref, out_ref):
    # gate_ref: (TB, C)      f32  VMEM  -- sigmoid(img @ W^T) * scale (precomputed)
    # snd_ref:  (TB, C, THW)      VMEM  -- flattened sound features (native dtype)
    # bias_ref: (1, 1)       f32  SMEM  -- scalar bias
    # out_ref:  (TB, THW)    f32  VMEM
    tb, c, thw = snd_ref.shape
    ch = min(c, 8 if jnp.dtype(snd_ref.dtype).itemsize >= 4 else 16)

    acc = jnp.zeros((tb, thw), jnp.float32)
    # Fully-unrolled chunked channel reduce: per-chunk f32 upcast, VPU multiply,
    # XLU sublane reduce.  Never materializes a (TB, C, THW) f32 intermediate.
    for k0 in range(0, c, ch):
        k1 = min(k0 + ch, c)
        g = gate_ref[:, k0:k1].astype(jnp.float32)            # (TB, ck)
        s = snd_ref[:, k0:k1, :].astype(jnp.float32)          # (TB, ck, THW)
        acc = acc + jnp.sum(g[:, :, None] * s, axis=1)        # (TB, THW)
    out_ref[...] = (acc + bias_ref[0, 0]).astype(out_ref.dtype)


def synthesizer_forward(feat_img, feat_sound, w_proj, scale, bias):
    """feat_img: (B, Dv); feat_sound: (B, C, H, W).
    w_proj: (C, Dv) (PyTorch Linear layout), scale: (C,), bias: (1,)."""
    B, Dv = feat_img.shape
    Bs, C, H, W = feat_sound.shape
    assert B == Bs and w_proj.shape == (C, Dv) and scale.shape == (C,)
    HW = H * W

    # Hoisted gate: one well-shaped XLA matmul + sigmoid + scale, kept in f32
    # (tiny, so the f32 gate costs nothing and preserves accuracy even when the
    # sound features are streamed in bf16).
    gate = jax.nn.sigmoid(
        jnp.dot(feat_img.astype(jnp.float32), w_proj.astype(jnp.float32).T)
    ) * scale.astype(jnp.float32)                                  # (B, C) f32

    # Stream the big operand in its native dtype (pass bf16 feat_sound upstream
    # to halve HBM traffic); the kernel upcasts per C-chunk and accumulates f32.
    snd = feat_sound.reshape(B, C, HW)            # metadata-only reshape, no copy
    itemsize = jnp.dtype(snd.dtype).itemsize

    vmem_cap = _vmem_capacity_bytes()
    vmem_budget = min(int(vmem_cap * 0.70), 96 << 20)   # ~45 MiB v7x, ~90 MiB v5e/v6e
    TB, THW = _pick_tiles(B, C, HW, itemsize, vmem_budget)

    grid = (pl.cdiv(B, TB), pl.cdiv(HW, THW))
    bias_smem = bias.reshape(1, 1).astype(jnp.float32)

    cost = pl.CostEstimate(
        flops=2 * B * C * HW,
        transcendentals=0,
        bytes_accessed=B * C * HW * itemsize + B * C * 4 + B * HW * 4)

    out_flat = pl.pallas_call(
        _synth_kernel,
        out_shape=jax.ShapeDtypeStruct((B, HW), jnp.float32),
        grid_spec=pltpu.PrefetchScalarGridSpec(
            num_scalar_prefetch=0,
            grid=grid,
            in_specs=[
                pl.BlockSpec((TB, C), lambda i, j: (i, 0)),           # gate tile
                pl.BlockSpec((TB, C, THW), lambda i, j: (i, 0, j)),   # sound tile
                pl.BlockSpec(memory_space=pltpu.MemorySpace.SMEM),    # bias scalar
            ],
            out_specs=pl.BlockSpec((TB, THW), lambda i, j: (i, j)),
        ),
        compiler_params=pltpu.CompilerParams(
            dimension_semantics=("parallel", "parallel"),
            vmem_limit_bytes=int(vmem_budget)),
        cost_estimate=cost,
    )(gate, snd, bias_smem)

    return out_flat.reshape(B, 1, H, W)


def _reference(feat_img, feat_sound, w_proj, scale, bias):
    B, C, H, W = feat_sound.shape
    proj = feat_img @ w_proj.T                                   # (B, C)
    gate = jax.nn.sigmoid(proj) * scale                          # (B, C)
    z = jnp.einsum('bc,bcs->bs', gate, feat_sound.reshape(B, C, -1))
    return z.reshape(B, 1, H, W) + bias


if __name__ == "__main__":
    key = jax.random.PRNGKey(0)
    B, vision_dim, fc_dim, H, W = 2, 256, 64, 16, 16

    k1, k2, k3 = jax.random.split(key, 3)
    feat_img = jax.random.normal(k1, (B, vision_dim), dtype=jnp.float32)
    feat_sound = jax.random.normal(k2, (B, fc_dim, H, W), dtype=jnp.float32)

    # Deterministic parameter init (shapes per module __init__):
    #   vision_proj.weight : (fc_dim, vision_dim), no bias
    #   scale              : ones(fc_dim)
    #   bias               : zeros(1)
    w_proj = (jax.random.normal(k3, (fc_dim, vision_dim), dtype=jnp.float32)
              * (1.0 / jnp.sqrt(vision_dim)))
    scale = jnp.ones((fc_dim,), dtype=jnp.float32)
    bias = jnp.zeros((1,), dtype=jnp.float32)

    out = synthesizer_forward(feat_img, feat_sound, w_proj, scale, bias)
    out = jax.block_until_ready(out)

    ref = _reference(feat_img, feat_sound, w_proj, scale, bias)
    assert out.shape == (B, 1, H, W)
    assert jnp.allclose(out, ref, atol=1e-4, rtol=1e-4)

    print("KERNEL_OK")
</pallas_src>

<mosaic_0001>
module attributes {stable_mosaic.version = 11 : i64} {
  func.func @_synth_kernel(%arg0: i32, %arg1: i32, %arg2: memref<2x64xf32, #tpu.memory_space<vmem>>, %arg3: memref<2x64x128xf32, #tpu.memory_space<vmem>>, %arg4: memref<1x1xf32, #tpu.memory_space<smem>>, %arg5: memref<2x128xf32, #tpu.memory_space<vmem>>) attributes {dimension_semantics = [#tpu.dimension_semantics<parallel>, #tpu.dimension_semantics<parallel>], iteration_bounds = array<i64: 1, 2>, scalar_prefetch = 0 : i64, scratch_operands = 0 : i64, tpu.core_type = #tpu.core_type<tc>, window_params = [{transform_indices = @transform_0, window_bounds = array<i64: 2, 64>}, {transform_indices = @transform_1, window_bounds = array<i64: 2, 64, 128>}, {transform_indices = @transform_2, window_bounds = array<i64: 1, 1>}, {transform_indices = @transform_3, window_bounds = array<i64: 2, 128>}]} {
    %cst = arith.constant 0.000000e+00 : f32
    %0 = vector.broadcast %cst : f32 to vector<2x128xf32>
    %c0 = arith.constant 0 : index
    %c0_0 = arith.constant 0 : index
    %1 = vector.load %arg2[%c0, %c0_0] : memref<2x64xf32, #tpu.memory_space<vmem>>, vector<2x8xf32>
    %c0_1 = arith.constant 0 : index
    %c0_2 = arith.constant 0 : index
    %c0_3 = arith.constant 0 : index
    %2 = vector.load %arg3[%c0_1, %c0_2, %c0_3] : memref<2x64x128xf32, #tpu.memory_space<vmem>>, vector<2x8x128xf32>
    %3 = vector.shape_cast %1 : vector<2x8xf32> to vector<2x8x1xf32>
    %4 = vector.broadcast %3 : vector<2x8x1xf32> to vector<2x8x128xf32>
    %5 = arith.mulf %4, %2 : vector<2x8x128xf32>
    %cst_4 = arith.constant dense<0.000000e+00> : vector<2x128xf32>
    %6 = vector.multi_reduction <add>, %5, %cst_4 [1] : vector<2x8x128xf32> to vector<2x128xf32>
    %7 = arith.addf %0, %6 : vector<2x128xf32>
    %c0_5 = arith.constant 0 : index
    %c8 = arith.constant 8 : index
    %8 = vector.load %arg2[%c0_5, %c8] : memref<2x64xf32, #tpu.memory_space<vmem>>, vector<2x8xf32>
    %c0_6 = arith.constant 0 : index
    %c8_7 = arith.constant 8 : index
    %c0_8 = arith.constant 0 : index
    %9 = vector.load %arg3[%c0_6, %c8_7, %c0_8] : memref<2x64x128xf32, #tpu.memory_space<vmem>>, vector<2x8x128xf32>
    %10 = vector.shape_cast %8 : vector<2x8xf32> to vector<2x8x1xf32>
    %11 = vector.broadcast %10 : vector<2x8x1xf32> to vector<2x8x128xf32>
    %12 = arith.mulf %11, %9 : vector<2x8x128xf32>
    %cst_9 = arith.constant dense<0.000000e+00> : vector<2x128xf32>
    %13 = vector.multi_reduction <add>, %12, %cst_9 [1] : vector<2x8x128xf32> to vector<2x128xf32>
    %14 = arith.addf %7, %13 : vector<2x128xf32>
    %c0_10 = arith.constant 0 : index
    %c16 = arith.constant 16 : index
    %15 = vector.load %arg2[%c0_10, %c16] : memref<2x64xf32, #tpu.memory_space<vmem>>, vector<2x8xf32>
    %c0_11 = arith.constant 0 : index
    %c16_12 = arith.constant 16 : index
    %c0_13 = arith.constant 0 : index
    %16 = vector.load %arg3[%c0_11, %c16_12, %c0_13] : memref<2x64x128xf32, #tpu.memory_space<vmem>>, vector<2x8x128xf32>
    %17 = vector.shape_cast %15 : vector<2x8xf32> to vector<2x8x1xf32>
    %18 = vector.broadcast %17 : vector<2x8x1xf32> to vector<2x8x128xf32>
    %19 = arith.mulf %18, %16 : vector<2x8x128xf32>
    %cst_14 = arith.constant dense<0.000000e+00> : vector<2x128xf32>
    %20 = vector.multi_reduction <add>, %19, %cst_14 [1] : vector<2x8x128xf32> to vector<2x128xf32>
    %21 = arith.addf %14, %20 : vector<2x128xf32>
    %c0_15 = arith.constant 0 : index
    %c24 = arith.constant 24 : index
    %22 = vector.load %arg2[%c0_15, %c24] : memref<2x64xf32, #tpu.memory_space<vmem>>, vector<2x8xf32>
    %c0_16 = arith.constant 0 : index
    %c24_17 = arith.constant 24 : index
    %c0_18 = arith.constant 0 : index
    %23 = vector.load %arg3[%c0_16, %c24_17, %c0_18] : memref<2x64x128xf32, #tpu.memory_space<vmem>>, vector<2x8x128xf32>
    %24 = vector.shape_cast %22 : vector<2x8xf32> to vector<2x8x1xf32>
    %25 = vector.broadcast %24 : vector<2x8x1xf32> to vector<2x8x128xf32>
    %26 = arith.mulf %25, %23 : vector<2x8x128xf32>
    %cst_19 = arith.constant dense<0.000000e+00> : vector<2x128xf32>
    %27 = vector.multi_reduction <add>, %26, %cst_19 [1] : vector<2x8x128xf32> to vector<2x128xf32>
    %28 = arith.addf %21, %27 : vector<2x128xf32>
    %c0_20 = arith.constant 0 : index
    %c32 = arith.constant 32 : index
    %29 = vector.load %arg2[%c0_20, %c32] : memref<2x64xf32, #tpu.memory_space<vmem>>, vector<2x8xf32>
    %c0_21 = arith.constant 0 : index
    %c32_22 = arith.constant 32 : index
    %c0_23 = arith.constant 0 : index
    %30 = vector.load %arg3[%c0_21, %c32_22, %c0_23] : memref<2x64x128xf32, #tpu.memory_space<vmem>>, vector<2x8x128xf32>
    %31 = vector.shape_cast %29 : vector<2x8xf32> to vector<2x8x1xf32>
    %32 = vector.broadcast %31 : vector<2x8x1xf32> to vector<2x8x128xf32>
    %33 = arith.mulf %32, %30 : vector<2x8x128xf32>
    %cst_24 = arith.constant dense<0.000000e+00> : vector<2x128xf32>
    %34 = vector.multi_reduction <add>, %33, %cst_24 [1] : vector<2x8x128xf32> to vector<2x128xf32>
    %35 = arith.addf %28, %34 : vector<2x128xf32>
    %c0_25 = arith.constant 0 : index
    %c40 = arith.constant 40 : index
    %36 = vector.load %arg2[%c0_25, %c40] : memref<2x64xf32, #tpu.memory_space<vmem>>, vector<2x8xf32>
    %c0_26 = arith.constant 0 : index
    %c40_27 = arith.constant 40 : index
    %c0_28 = arith.constant 0 : index
    %37 = vector.load %arg3[%c0_26, %c40_27, %c0_28] : memref<2x64x128xf32, #tpu.memory_space<vmem>>, vector<2x8x128xf32>
    %38 = vector.shape_cast %36 : vector<2x8xf32> to vector<2x8x1xf32>
    %39 = vector.broadcast %38 : vector<2x8x1xf32> to vector<2x8x128xf32>
    %40 = arith.mulf %39, %37 : vector<2x8x128xf32>
    %cst_29 = arith.constant dense<0.000000e+00> : vector<2x128xf32>
    %41 = vector.multi_reduction <add>, %40, %cst_29 [1] : vector<2x8x128xf32> to vector<2x128xf32>
    %42 = arith.addf %35, %41 : vector<2x128xf32>
    %c0_30 = arith.constant 0 : index
    %c48 = arith.constant 48 : index
    %43 = vector.load %arg2[%c0_30, %c48] : memref<2x64xf32, #tpu.memory_space<vmem>>, vector<2x8xf32>
    %c0_31 = arith.constant 0 : index
    %c48_32 = arith.constant 48 : index
    %c0_33 = arith.constant 0 : index
    %44 = vector.load %arg3[%c0_31, %c48_32, %c0_33] : memref<2x64x128xf32, #tpu.memory_space<vmem>>, vector<2x8x128xf32>
    %45 = vector.shape_cast %43 : vector<2x8xf32> to vector<2x8x1xf32>
    %46 = vector.broadcast %45 : vector<2x8x1xf32> to vector<2x8x128xf32>
    %47 = arith.mulf %46, %44 : vector<2x8x128xf32>
    %cst_34 = arith.constant dense<0.000000e+00> : vector<2x128xf32>
    %48 = vector.multi_reduction <add>, %47, %cst_34 [1] : vector<2x8x128xf32> to vector<2x128xf32>
    %49 = arith.addf %42, %48 : vector<2x128xf32>
    %c0_35 = arith.constant 0 : index
    %c56 = arith.constant 56 : index
    %50 = vector.load %arg2[%c0_35, %c56] : memref<2x64xf32, #tpu.memory_space<vmem>>, vector<2x8xf32>
    %c0_36 = arith.constant 0 : index
    %c56_37 = arith.constant 56 : index
    %c0_38 = arith.constant 0 : index
    %51 = vector.load %arg3[%c0_36, %c56_37, %c0_38] : memref<2x64x128xf32, #tpu.memory_space<vmem>>, vector<2x8x128xf32>
    %52 = vector.shape_cast %50 : vector<2x8xf32> to vector<2x8x1xf32>
    %53 = vector.broadcast %52 : vector<2x8x1xf32> to vector<2x8x128xf32>
    %54 = arith.mulf %53, %51 : vector<2x8x128xf32>
    %cst_39 = arith.constant dense<0.000000e+00> : vector<2x128xf32>
    %55 = vector.multi_reduction <add>, %54, %cst_39 [1] : vector<2x8x128xf32> to vector<2x128xf32>
    %56 = arith.addf %49, %55 : vector<2x128xf32>
    %c0_40 = arith.constant 0 : index
    %c0_41 = arith.constant 0 : index
    %57 = memref.load %arg4[%c0_40, %c0_41] : memref<1x1xf32, #tpu.memory_space<smem>>
    %58 = vector.broadcast %57 : f32 to vector<2x128xf32>
    %59 = arith.addf %56, %58 : vector<2x128xf32>
    %c0_42 = arith.constant 0 : index
    %c0_43 = arith.constant 0 : index
    %60 = vector.load %arg5[%c0_42, %c0_43] : memref<2x128xf32, #tpu.memory_space<vmem>>, vector<2x128xf32>
    tpu.vector_store %arg5[%c0_42, %c0_43], %59 {strides = array<i32>} : memref<2x128xf32, #tpu.memory_space<vmem>>, vector<2x128xf32>,
    return
  }
  func.func @transform_0(%arg0: i32, %arg1: i32) -> (i32, i32) {
    %c0_i32 = arith.constant 0 : i32
    %c0_i32_0 = arith.constant 0 : i32
    return %arg0, %c0_i32 : i32, i32
  }
  func.func @transform_1(%arg0: i32, %arg1: i32) -> (i32, i32, i32) {
    %c0_i32 = arith.constant 0 : i32
    %c0_i32_0 = arith.constant 0 : i32
    return %arg0, %c0_i32, %arg1 : i32, i32, i32
  }
  func.func @transform_2(%arg0: i32, %arg1: i32) -> (i32, i32) {
    %c0_i32 = arith.constant 0 : i32
    %c0_i32_0 = arith.constant 0 : i32
    %c0_i32_1 = arith.constant 0 : i32
    return %c0_i32, %c0_i32_0 : i32, i32
  }
  func.func @transform_3(%arg0: i32, %arg1: i32) -> (i32, i32) {
    %c0_i32 = arith.constant 0 : i32
    return %arg0, %arg1 : i32, i32
  }
}

</mosaic_0001>

<llo_original>
// kernel: tpu_custom_call.1
$region0: #{tpu_custom_call.1}
  #allocation0 [shape = 'u32[]', space=smem, size = 0x4, offset = 0x4, fixed_abs, tag = 'smem constant byte address 0x4 - core index']
  #allocation1 [shape = 'u32[144,128]{1,0:T(1,128)}', space=vmem, size = 0x12000, scoped, tag = 'internal scratch']
  #allocation2 [shape = 'f32[1,1]{1,0:T(1,128)S(6)}', space=smem, size = 0x200, scoped, tag = 'scoped memory for tpu_custom_call.1']
  %s0 = inlined_call_operand.vmem [shape: f32[2,64], index: 0, kind: input, shape index: {}]
  %s1 = inlined_call_operand.hbm [shape: f32[2,64,256], index: 1, kind: input, shape index: {}]
  %s2 = inlined_call_operand.<no memory space> [shape: f32[1,1], index: 2, kind: input, shape index: {}]
  %s3 = inlined_call_operand.hbm [shape: f32[2,256], index: 3, kind: output, shape index: {}]
  %s4 = sld [smem:[#allocation0]]
  $region49: #{tpu_custom_call.1} parent=0
    _
  %s6 = ssub.s32 1, %s4
  %s7 = scalar_select 0, %s6, %s4
  %8 = sst [smem:[#allocation2]] %s2
  $region1: #{tpu_custom_call.1} parent=0
    #allocation3 [shape = 'u8[131072]{0}', space=vmem, size = 0x20000, scoped, tag = 'input window, operand 1']
    #allocation4 [shape = 's32[2]{0}', space=sflag, size = 0x8, scoped, tag = 'scoped memory for tpu_custom_call.1']
    #allocation5 [shape = 's32[2]{0}', space=sflag, size = 0x8, scoped, tag = 'scoped memory for tpu_custom_call.1']
    #allocation6 [shape = 'u8[2048]{0}', space=vmem, size = 0x800, scoped, tag = 'output window, operand 0']
    %9 = vsyncpa [#allocation4], 0
    %s10 = scalar_lea.sflag [#allocation4], 1
    %11 = vsyncpa %s10, 0
    %12 = vsyncpa [#allocation5], 0
    %s13 = scalar_lea.sflag [#allocation5], 1
    %14 = vsyncpa %s13, 0
    loop: start=0, step=1, limit=4
    $region2: #{tpu_custom_call.1} parent=1 // loop_pre_header
      _
    $region3: #{tpu_custom_call.1} parent=1 // loop_header
      %s16 = sphi 0, %s20
      %p17 = scmp.ge.s32.totalorder %s16, 4
      %s23 = sphi 0, %s35
      %s24 = sphi 0, %s31
      %s25 = sphi 0, %s23
      %s26 = sphi 0, %s24
      %s27 = sphi 0, %s25
      %s28 = sphi 0, %s26
      %s38 = sphi 0, %s40
      %s41 = sphi 0, %s38
      %s42 = sphi 0, %s41
      %s58 = sphi 0, %s42
      %s66 = sphi 0, %s68
      %s69 = sphi 0, %s66
      %s70 = sphi 0, %s69
      %s86 = sphi 0, %s70
      %s90 = sphi 0, %s90
      %s92 = sphi 0, %s90
      %s93 = sphi 0, %s92
      %s107 = sphi 0, %s93
      %s115 = sphi 0, %s117
      %s118 = sphi 0, %s115
      %s119 = sphi 0, %s118
      %s135 = sphi 0, %s119
    $region4: #{tpu_custom_call.1} parent=1 // loop_header_branch
      %19 = sbr.rel (%p17) target = $region8
    $region5: #{tpu_custom_call.1} parent=1 // loop_body
      %s21 = ssub.s32 %s16, 1
      %s22 = ssub.s32 %s16, 2
      %s29 = sadd.s32 1, %s24
      %p30 = scmp.ge.s32.totalorder %s29, 2
      %s31 = scalar_select %p30, 0, %s29
      %s32 = sadd.s32 1, %s23
      %s33 = scalar_select %p30, %s32, %s23
      %p34 = scmp.ge.s32.totalorder %s33, 1
      %s35 = scalar_select %p34, 0, %s33
      %s36 = ssub.s32 %s23, %s35
      %p37 = scmp.eq.s32.totalorder %s36, 0
      %s39 = sadd.s32 %s38, 1
      %s40 = scalar_select %p37, %s38, %s39
      %p43 = pneg %p37
      %p44 = scmp.eq.s32.totalorder %s16, 1
      %p45 = por %p43, %p44
      %p46 = scmp.ne.s32.totalorder %s38, %s41
      %p47 = scmp.eq.s32.totalorder %s16, 0
      %p48 = por %p46, %p47
      %p49 = scmp.ne.s32.totalorder %s38, %s41
      %p50 = scmp.eq.s32.totalorder %s21, 1
      %p51 = por %p49, %p50
      %p52 = scmp.ne.s32.totalorder %s41, %s42
      %p53 = scmp.eq.s32.totalorder %s21, 0
      %p54 = por %p52, %p53
      %p55 = scmp.ne.s32.totalorder %s41, %s42
      %p56 = scmp.eq.s32.totalorder %s22, 1
      %p57 = por %p55, %p56
      %p59 = scmp.ne.s32.totalorder %s42, %s58
      %p60 = scmp.eq.s32.totalorder %s22, 0
      %p61 = por %p59, %p60
      %s62 = ssub.s32 %s23, %s35
      %s63 = ssub.s32 %s24, %s31
      %s64 = sor.u32 %s62, %s63
      %p65 = scmp.eq.s32.totalorder %s64, 0
      %s67 = sadd.s32 %s66, 1
      %s68 = scalar_select %p65, %s66, %s67
      %p71 = pneg %p65
      %p72 = scmp.eq.s32.totalorder %s16, 1
      %p73 = por %p71, %p72
      %p74 = scmp.ne.s32.totalorder %s66, %s69
      %p75 = scmp.eq.s32.totalorder %s16, 0
      %p76 = por %p74, %p75
      %p77 = scmp.ne.s32.totalorder %s66, %s69
      %p78 = scmp.eq.s32.totalorder %s21, 1
      %p79 = por %p77, %p78
      %p80 = scmp.ne.s32.totalorder %s69, %s70
      %p81 = scmp.eq.s32.totalorder %s21, 0
      %p82 = por %p80, %p81
      %p83 = scmp.ne.s32.totalorder %s69, %s70
      %p84 = scmp.eq.s32.totalorder %s22, 1
      %p85 = por %p83, %p84
      %p87 = scmp.ne.s32.totalorder %s70, %s86
      %p88 = scmp.eq.s32.totalorder %s22, 0
      %p89 = por %p87, %p88
      %s91 = sadd.s32 %s90, 1
      %p94 = scmp.eq.s32.totalorder %s16, 1
      %p95 = scmp.ne.s32.totalorder %s90, %s92
      %p96 = scmp.eq.s32.totalorder %s16, 0
      %p97 = por %p95, %p96
      %p98 = scmp.ne.s32.totalorder %s90, %s92
      %p99 = scmp.eq.s32.totalorder %s21, 1
      %p100 = por %p98, %p99
      %p101 = scmp.ne.s32.totalorder %s92, %s93
      %p102 = scmp.eq.s32.totalorder %s21, 0
      %p103 = por %p101, %p102
      %p104 = scmp.ne.s32.totalorder %s92, %s93
      %p105 = scmp.eq.s32.totalorder %s22, 1
      %p106 = por %p104, %p105
      %p108 = scmp.ne.s32.totalorder %s93, %s107
      %p109 = scmp.eq.s32.totalorder %s22, 0
      %p110 = por %p108, %p109
      %s111 = ssub.s32 %s23, %s35
      %s112 = ssub.s32 %s24, %s31
      %s113 = sor.u32 %s111, %s112
      %p114 = scmp.eq.s32.totalorder %s113, 0
      %s116 = sadd.s32 %s115, 1
      %s117 = scalar_select %p114, %s115, %s116
      %p120 = pneg %p114
      %p121 = scmp.eq.s32.totalorder %s16, 1
      %p122 = por %p120, %p121
      %p123 = scmp.ne.s32.totalorder %s115, %s118
      %p124 = scmp.eq.s32.totalorder %s16, 0
      %p125 = por %p123, %p124
      %p126 = scmp.ne.s32.totalorder %s115, %s118
      %p127 = scmp.eq.s32.totalorder %s21, 1
      %p128 = por %p126, %p127
      %p129 = scmp.ne.s32.totalorder %s118, %s119
      %p130 = scmp.eq.s32.totalorder %s21, 0
      %p131 = por %p129, %p130
      %p132 = scmp.ne.s32.totalorder %s118, %s119
      %p133 = scmp.eq.s32.totalorder %s22, 1
      %p134 = por %p132, %p133
      %p136 = scmp.ne.s32.totalorder %s119, %s135
      %p137 = scmp.eq.s32.totalorder %s22, 0
      %p138 = por %p136, %p137
      %p139 = scmp.le.s32.totalorder 1, %s16
      %p140 = scmp.lt.s32.totalorder %s16, 3
      %p141 = pnand %p139, %p140
      %p142 = pneg %p141
      // Predicated region
      $region9: #{tpu_custom_call.1} parent=5 // pred_check
        _
      $region10: #{tpu_custom_call.1} parent=5 // pred_check_branch
        %144 = sbr.rel (%p141) target = $region12
      $region11: #{tpu_custom_call.1} parent=5 // pred_region
        %s145 = ssub.s32 %s16, 1
        // Predicated region
        $region13: #{tpu_custom_call.1} parent=11 // pred_check
          %p146 = pneg %p54
        $region14: #{tpu_custom_call.1} parent=11 // pred_check_branch
          %148 = sbr.rel (%p146) target = $region16
        $region15: #{tpu_custom_call.1} parent=11 // pred_region
          %p149 = scmp.lt.s32.totalorder %s25, 0
          %s150 = scalar_select %p149, %s25, 0
          %s151 = smul.addr %s150, 2
          %s152 = scalar_lea.vmem %s0, %s151
        $region16: #{tpu_custom_call.1} parent=11 // pred_fallthru
          _
        // Predicated region
        $region17: #{tpu_custom_call.1} parent=11 // pred_check
          %p153 = pneg %p103
        $region18: #{tpu_custom_call.1} parent=11 // pred_check_branch
          %155 = sbr.rel (%p153) target = $region20
        $region19: #{tpu_custom_call.1} parent=11 // pred_region
          _
        $region20: #{tpu_custom_call.1} parent=11 // pred_fallthru
          _
      $region12: #{tpu_custom_call.1} parent=5 // pred_fallthru
        _
      %p156 = scmp.lt.s32.totalorder %s16, 2
      // Predicated region
      $region21: #{tpu_custom_call.1} parent=5 // pred_check
        %p157 = pneg %p156
      $region22: #{tpu_custom_call.1} parent=5 // pred_check_branch
        %159 = sbr.rel (%p157) target = $region24
      $region23: #{tpu_custom_call.1} parent=5 // pred_region
        // Predicated region
        $region25: #{tpu_custom_call.1} parent=23 // pred_check
          %p160 = pneg %p76
        $region26: #{tpu_custom_call.1} parent=23 // pred_check_branch
          %162 = sbr.rel (%p160) target = $region28
        $region27: #{tpu_custom_call.1} parent=23 // pred_region
          %s163 = sand.u32 %s66, 1
          %s164 = scalar_lea.sflag [#allocation4], %s163
          %s165 = sand.u32 %s66, 1
          %s166 = smul.addr %s165, 128
          %s167 = scalar_lea.vmem [#allocation3], %s166
          %s168 = smul.u32 2, %s23
          %s170 = ssub.s32 2048, 2048
          %171 = vsyncadd %s164, %s170
          %s172 = smul.addr %s168, 16
          %s173 = sadd.s32 %s24, %s172
          %s174 = smul.addr %s173, 128
          %s175 = scalar_lea.hbm %s1, %s174
          %s176 = sshll.u32 %s167, 4
          %s177 = int_to_ptr.vmem [resolvable:$true] %s176
          %182 = dma.hbm_to_vmem [thread:$0]  %s175, 2048, %s177, %s164, 256, 128, 8
        $region28: #{tpu_custom_call.1} parent=23 // pred_fallthru
          _
      $region24: #{tpu_custom_call.1} parent=5 // pred_fallthru
        _
      %p183 = scmp.le.s32.totalorder 1, %s16
      %p184 = scmp.lt.s32.totalorder %s16, 3
      %p185 = pnand %p183, %p184
      %p186 = pneg %p185
      // Predicated region
      $region29: #{tpu_custom_call.1} parent=5 // pred_check
        _
      $region30: #{tpu_custom_call.1} parent=5 // pred_check_branch
        %188 = sbr.rel (%p185) target = $region32
      $region31: #{tpu_custom_call.1} parent=5 // pred_region
        %s189 = ssub.s32 %s16, 1
        %s190 = sand.u32 %s69, 1
        %s191 = scalar_lea.sflag [#allocation4], %s190
        %s192 = sand.u32 %s69, 1
        %s193 = smul.addr %s192, 128
        %s194 = scalar_lea.vmem [#allocation3], %s193
        // Predicated region
        $region33: #{tpu_custom_call.1} parent=31 // pred_check
          %p195 = pneg %p82
        $region34: #{tpu_custom_call.1} parent=31 // pred_check_branch
          %197 = sbr.rel (%p195) target = $region36
        $region35: #{tpu_custom_call.1} parent=31 // pred_region
          %198 = dma.done %s191, 2048
        $region36: #{tpu_custom_call.1} parent=31 // pred_fallthru
          _
        %p199 = scmp.lt.s32.totalorder %s25, 0
        %s200 = scalar_select %p199, %s25, 0
        %s201 = smul.addr %s200, 2
        %s202 = scalar_lea.vmem %s0, %s201
        %p203 = pneg %p54
        %p204 = pneg %p51
        %s205 = sand.u32 %s69, 1
        %s206 = scalar_lea.sflag [#allocation4], %s205
        %s207 = sand.u32 %s69, 1
        %s208 = smul.addr %s207, 128
        %s209 = scalar_lea.vmem [#allocation3], %s208
        %p210 = pneg %p82
        %p211 = pneg %p79
        %p212 = pneg %p103
        %p213 = pneg %p100
        %p214 = pneg %p131
        %p215 = pneg %p128
        %s216 = sand.u32 %s118, 1
        %s217 = scalar_lea.sflag [#allocation5], %s216
        %s218 = sand.u32 %s118, 1
        %s219 = smul.addr %s218, 2
        %s220 = scalar_lea.vmem [#allocation6], %s219
        %p221 = scmp.lt.s32.totalorder %s25, 0
        %s222 = scalar_select %p221, %s25, 0
        %s223 = smul.addr %s222, 2
        %s224 = scalar_lea.vmem %s0, %s223
        %s225 = smul.u32 2, %s25
        %v226 = vld [vmem:[%s224] sm:$0x3]
        %v227 = vld [vmem:[%s194] sm:$0xff]
        %v228 = vld [vmem:[%s194 + $0x40] sm:$0xff]
        %v229 = vlaneseq
        %v230 = vshrl.u32 %v229, 7
        %v231 = vsub.s32 0, %v230
        %v232 = vrot.slane %v226, %v231
        %234 = vbcast.lane.b32.xlu0 %v232, 256
        %v235 = vpop.permute.xlu0 %234
        %v236 = vlaneseq
        %v237 = vshrl.u32 %v236, 7
        %v238 = vsub.s32 1, %v237
        %v239 = vrot.slane %v226, %v238
        %241 = vbcast.lane.b32.xlu0 %v239, 256
        %v242 = vpop.permute.xlu0 %241
        %v243 = vmul.f32 %v235, %v227
        %v244 = vmul.f32 %v242, %v228
        %v245 = vrot.slane %v243, 4
        %v246 = vadd.f32 %v243, %v245
        %v247 = vrot.slane %v246, 2
        %v248 = vadd.f32 %v246, %v247
        %v249 = vrot.slane %v248, 1
        %v250 = vadd.f32 %v248, %v249
        %v251 = vrot.slane %v244, 4
        %v252 = vadd.f32 %v244, %v251
        %v253 = vrot.slane %v252, 2
        %v254 = vadd.f32 %v252, %v253
        %v255 = vrot.slane %v254, 1
        %v256 = vadd.f32 %v254, %v255
        %v257 = vadd.f32 %v250, 0.0
        %v258 = vadd.f32 %v256, 0.0
        %v259 = vld [vmem:[%s194 + $0x8] sm:$0xff]
        %v260 = vld [vmem:[%s194 + $0x48] sm:$0xff]
        %s262 = sor.u32 256, 8
        %263 = vbcast.lane.b32.xlu0 %v232, %s262
        %v264 = vpop.permute.xlu0 %263
        %s266 = sor.u32 256, 8
        %267 = vbcast.lane.b32.xlu0 %v239, %s266
        %v268 = vpop.permute.xlu0 %267
        %v269 = vmul.f32 %v264, %v259
        %v270 = vmul.f32 %v268, %v260
        %v271 = vrot.slane %v269, 4
        %v272 = vadd.f32 %v269, %v271
        %v273 = vrot.slane %v272, 2
        %v274 = vadd.f32 %v272, %v273
        %v275 = vrot.slane %v274, 1
        %v276 = vadd.f32 %v274, %v275
        %v277 = vrot.slane %v270, 4
        %v278 = vadd.f32 %v270, %v277
        %v279 = vrot.slane %v278, 2
        %v280 = vadd.f32 %v278, %v279
        %v281 = vrot.slane %v280, 1
        %v282 = vadd.f32 %v280, %v281
        %v283 = vadd.f32 %v257, %v276
        %v284 = vadd.f32 %v258, %v282
        %v285 = vld [vmem:[%s194 + $0x10] sm:$0xff]
        %v286 = vld [vmem:[%s194 + $0x50] sm:$0xff]
        %s288 = sor.u32 256, 16
        %289 = vbcast.lane.b32.xlu0 %v232, %s288
        %v290 = vpop.permute.xlu0 %289
        %s292 = sor.u32 256, 16
        %293 = vbcast.lane.b32.xlu0 %v239, %s292
        %v294 = vpop.permute.xlu0 %293
        %v295 = vmul.f32 %v290, %v285
        %v296 = vmul.f32 %v294, %v286
        %v297 = vrot.slane %v295, 4
        %v298 = vadd.f32 %v295, %v297
        %v299 = vrot.slane %v298, 2
        %v300 = vadd.f32 %v298, %v299
        %v301 = vrot.slane %v300, 1
        %v302 = vadd.f32 %v300, %v301
        %v303 = vrot.slane %v296, 4
        %v304 = vadd.f32 %v296, %v303
        %v305 = vrot.slane %v304, 2
        %v306 = vadd.f32 %v304, %v305
        %v307 = vrot.slane %v306, 1
        %v308 = vadd.f32 %v306, %v307
        %v309 = vadd.f32 %v283, %v302
        %v310 = vadd.f32 %v284, %v308
        %v311 = vld [vmem:[%s194 + $0x18] sm:$0xff]
        %v312 = vld [vmem:[%s194 + $0x58] sm:$0xff]
        %s314 = sor.u32 256, 24
        %315 = vbcast.lane.b32.xlu0 %v232, %s314
        %v316 = vpop.permute.xlu0 %315
        %s318 = sor.u32 256, 24
        %319 = vbcast.lane.b32.xlu0 %v239, %s318
        %v320 = vpop.permute.xlu0 %319
        %v321 = vmul.f32 %v316, %v311
        %v322 = vmul.f32 %v320, %v312
        %v323 = vrot.slane %v321, 4
        %v324 = vadd.f32 %v321, %v323
        %v325 = vrot.slane %v324, 2
        %v326 = vadd.f32 %v324, %v325
        %v327 = vrot.slane %v326, 1
        %v328 = vadd.f32 %v326, %v327
        %v329 = vrot.slane %v322, 4
        %v330 = vadd.f32 %v322, %v329
        %v331 = vrot.slane %v330, 2
        %v332 = vadd.f32 %v330, %v331
        %v333 = vrot.slane %v332, 1
        %v334 = vadd.f32 %v332, %v333
        %v335 = vadd.f32 %v309, %v328
        %v336 = vadd.f32 %v310, %v334
        %v337 = vld [vmem:[%s194 + $0x20] sm:$0xff]
        %v338 = vld [vmem:[%s194 + $0x60] sm:$0xff]
        %s340 = sor.u32 256, 32
        %341 = vbcast.lane.b32.xlu0 %v232, %s340
        %v342 = vpop.permute.xlu0 %341
        %s344 = sor.u32 256, 32
        %345 = vbcast.lane.b32.xlu0 %v239, %s344
        %v346 = vpop.permute.xlu0 %345
        %v347 = vmul.f32 %v342, %v337
        %v348 = vmul.f32 %v346, %v338
        %v349 = vrot.slane %v347, 4
        %v350 = vadd.f32 %v347, %v349
        %v351 = vrot.slane %v350, 2
        %v352 = vadd.f32 %v350, %v351
        %v353 = vrot.slane %v352, 1
        %v354 = vadd.f32 %v352, %v353
        %v355 = vrot.slane %v348, 4
        %v356 = vadd.f32 %v348, %v355
        %v357 = vrot.slane %v356, 2
        %v358 = vadd.f32 %v356, %v357
        %v359 = vrot.slane %v358, 1
        %v360 = vadd.f32 %v358, %v359
        %v361 = vadd.f32 %v335, %v354
        %v362 = vadd.f32 %v336, %v360
        %v363 = vld [vmem:[%s194 + $0x28] sm:$0xff]
        %v364 = vld [vmem:[%s194 + $0x68] sm:$0xff]
        %s366 = sor.u32 256, 40
        %367 = vbcast.lane.b32.xlu0 %v232, %s366
        %v368 = vpop.permute.xlu0 %367
        %s370 = sor.u32 256, 40
        %371 = vbcast.lane.b32.xlu0 %v239, %s370
        %v372 = vpop.permute.xlu0 %371
        %v373 = vmul.f32 %v368, %v363
        %v374 = vmul.f32 %v372, %v364
        %v375 = vrot.slane %v373, 4
        %v376 = vadd.f32 %v373, %v375
        %v377 = vrot.slane %v376, 2
        %v378 = vadd.f32 %v376, %v377
        %v379 = vrot.slane %v378, 1
        %v380 = vadd.f32 %v378, %v379
        %v381 = vrot.slane %v374, 4
        %v382 = vadd.f32 %v374, %v381
        %v383 = vrot.slane %v382, 2
        %v384 = vadd.f32 %v382, %v383
        %v385 = vrot.slane %v384, 1
        %v386 = vadd.f32 %v384, %v385
        %v387 = vadd.f32 %v361, %v380
        %v388 = vadd.f32 %v362, %v386
        %v389 = vld [vmem:[%s194 + $0x30] sm:$0xff]
        %v390 = vld [vmem:[%s194 + $0x70] sm:$0xff]
        %s392 = sor.u32 256, 48
        %393 = vbcast.lane.b32.xlu0 %v232, %s392
        %v394 = vpop.permute.xlu0 %393
        %s396 = sor.u32 256, 48
        %397 = vbcast.lane.b32.xlu0 %v239, %s396
        %v398 = vpop.permute.xlu0 %397
        %v399 = vmul.f32 %v394, %v389
        %v400 = vmul.f32 %v398, %v390
        %v401 = vrot.slane %v399, 4
        %v402 = vadd.f32 %v399, %v401
        %v403 = vrot.slane %v402, 2
        %v404 = vadd.f32 %v402, %v403
        %v405 = vrot.slane %v404, 1
        %v406 = vadd.f32 %v404, %v405
        %v407 = vrot.slane %v400, 4
        %v408 = vadd.f32 %v400, %v407
        %v409 = vrot.slane %v408, 2
        %v410 = vadd.f32 %v408, %v409
        %v411 = vrot.slane %v410, 1
        %v412 = vadd.f32 %v410, %v411
        %v413 = vadd.f32 %v387, %v406
        %v414 = vadd.f32 %v388, %v412
        %v415 = vld [vmem:[%s194 + $0x38] sm:$0xff]
        %v416 = vld [vmem:[%s194 + $0x78] sm:$0xff]
        %s418 = sor.u32 256, 56
        %419 = vbcast.lane.b32.xlu0 %v232, %s418
        %v420 = vpop.permute.xlu0 %419
        %s422 = sor.u32 256, 56
        %423 = vbcast.lane.b32.xlu0 %v239, %s422
        %v424 = vpop.permute.xlu0 %423
        %v425 = vmul.f32 %v420, %v415
        %v426 = vmul.f32 %v424, %v416
        %v427 = vrot.slane %v425, 4
        %v428 = vadd.f32 %v425, %v427
        %v429 = vrot.slane %v428, 2
        %v430 = vadd.f32 %v428, %v429
        %v431 = vrot.slane %v430, 1
        %v432 = vadd.f32 %v430, %v431
        %v433 = vrot.slane %v426, 4
        %v434 = vadd.f32 %v426, %v433
        %v435 = vrot.slane %v434, 2
        %v436 = vadd.f32 %v434, %v435
        %v437 = vrot.slane %v436, 1
        %v438 = vadd.f32 %v436, %v437
        %v439 = vadd.f32 %v413, %v432
        %v440 = vadd.f32 %v414, %v438
        %s441 = sld [smem:[#allocation2]]
        %v442 = vstv %s441
        %v443 = vadd.f32 %v439, %v442
        %v444 = vadd.f32 %v440, %v442
        %vm447 = vcmask 1041409
        %v448 = vsel %vm447, %v444, %v443
        %450 = vst [vmem:[%s220] sm:$0x3] %v448
        %s451 = sand.u32 %s118, 1
        %s452 = scalar_lea.sflag [#allocation5], %s451
        %s453 = sand.u32 %s118, 1
        %s454 = smul.addr %s453, 2
        %s455 = scalar_lea.vmem [#allocation6], %s454
        // Predicated region
        $region37: #{tpu_custom_call.1} parent=31 // pred_check
          %p456 = pneg %p128
        $region38: #{tpu_custom_call.1} parent=31 // pred_check_branch
          %458 = sbr.rel (%p456) target = $region40
        $region39: #{tpu_custom_call.1} parent=31 // pred_region
          %s460 = ssub.s32 32, 32
          %461 = vsyncadd %s452, %s460
          %s462 = smul.addr %s25, 2
          %s463 = sadd.s32 %s26, %s462
          %s464 = smul.addr %s463, 32
          %s465 = scalar_lea.hbm %s3, %s464
          %s467 = sshll.u32 %s455, 4
          %s468 = int_to_ptr.vmem [resolvable:$true] %s467
          %470 = dma.vmem_to_hbm [thread:$0]  %s468, 32, %s465, %s452
        $region40: #{tpu_custom_call.1} parent=31 // pred_fallthru
          _
      $region32: #{tpu_custom_call.1} parent=5 // pred_fallthru
        _
      %p471 = scmp.le.s32.totalorder 2, %s16
      // Predicated region
      $region41: #{tpu_custom_call.1} parent=5 // pred_check
        %p472 = pneg %p471
      $region42: #{tpu_custom_call.1} parent=5 // pred_check_branch
        %474 = sbr.rel (%p472) target = $region44
      $region43: #{tpu_custom_call.1} parent=5 // pred_region
        %s475 = ssub.s32 %s16, 2
        // Predicated region
        $region45: #{tpu_custom_call.1} parent=43 // pred_check
          %p476 = pneg %p134
        $region46: #{tpu_custom_call.1} parent=43 // pred_check_branch
          %478 = sbr.rel (%p476) target = $region48
        $region47: #{tpu_custom_call.1} parent=43 // pred_region
          %s479 = sand.u32 %s119, 1
          %s480 = scalar_lea.sflag [#allocation5], %s479
          %s481 = sand.u32 %s119, 1
          %s482 = smul.addr %s481, 2
          %s483 = scalar_lea.vmem [#allocation6], %s482
          %484 = dma.done %s480, 32
        $region48: #{tpu_custom_call.1} parent=43 // pred_fallthru
          _
      $region44: #{tpu_custom_call.1} parent=5 // pred_fallthru
        _
    $region6: #{tpu_custom_call.1} parent=1 // loop_footer
      %s20 = sadd.s32 1, %s16
    $region7: #{tpu_custom_call.1} parent=1 // loop_footer_branch
      %15 = sbr.rel target = $region3
    $region8: #{tpu_custom_call.1} parent=1 // loop_exit
      _
    %485 = vsyncpa [#allocation4], 1
    %s486 = scalar_lea.sflag [#allocation4], 1
    %487 = vsyncpa %s486, 1
    %488 = vsyncpa [#allocation5], 1
    %s489 = scalar_lea.sflag [#allocation5], 1
    %490 = vsyncpa %s489, 1

</llo_original>
